<compile_context>
chip_gen: v6e
topology: v6e:2x2x1
jax: 0.10.0
libtpu: 0.0.40
codegen_flags: <defaults>
</compile_context>

<pallas_src>
import jax
import jax.numpy as jnp
from jax.experimental import pallas as pl
from jax.experimental.pallas import tpu as pltpu


# --------------------------------------------------------------------------
# Kernels
# --------------------------------------------------------------------------
def _one_dot_kernel(x_ref, w_ref, b_ref, o_ref):
    # out = x @ W + b.  Activations are cast to the (bf16) weight dtype on the
    # VPU so the MXU runs a native bf16 matmul with f32 accumulation.
    w = w_ref[...]
    acc = jnp.dot(x_ref[...].astype(w.dtype), w,
                  preferred_element_type=jnp.float32)
    o_ref[...] = (acc + b_ref[...]).astype(o_ref.dtype)


def _two_dot_kernel(g_ref, f_ref, wg_ref, wf_ref, b_ref, o_ref):
    # out = g @ W_g + f @ W_f + b == Linear(concat([g, f], axis=1)), but with
    # zero cross-lane shuffling: two MXU dots into one f32 accumulator.
    wg = wg_ref[...]
    wf = wf_ref[...]
    acc = jnp.dot(g_ref[...].astype(wg.dtype), wg,
                  preferred_element_type=jnp.float32)
    acc = acc + jnp.dot(f_ref[...].astype(wf.dtype), wf,
                        preferred_element_type=jnp.float32)
    o_ref[...] = (acc + b_ref[...]).astype(o_ref.dtype)


def _one_dot_ktiled_kernel(x_ref, w_ref, b_ref, o_ref, acc_ref):
    # K-tiled variant for very large in_dim: accumulate partial products over
    # the innermost "arbitrary" K grid axis in an f32 VMEM scratch.
    k = pl.program_id(2)

    @pl.when(k == 0)
    def _():
        acc_ref[...] = jnp.zeros_like(acc_ref)

    w = w_ref[...]
    acc_ref[...] += jnp.dot(x_ref[...].astype(w.dtype), w,
                            preferred_element_type=jnp.float32)

    @pl.when(k == pl.num_programs(2) - 1)
    def _():
        o_ref[...] = (acc_ref[...] + b_ref[...]).astype(o_ref.dtype)


# --------------------------------------------------------------------------
# Helpers
# --------------------------------------------------------------------------
def _round_up(x, m):
    return (x + m - 1) // m * m


def _cdiv(a, b):
    return -(-a // b)


def _row_granularity(itemsize):
    # Rows per vreg sublane group: 8 for 4-byte, 16 for 2-byte, 32 for 1-byte.
    return {4: 8, 2: 16, 1: 32}.get(int(itemsize), 8)


def _vmem_budgets():
    """Generation-aware scoped-VMEM limit and tiling budget.

    v5e/v6e have 128 MiB VMEM per TensorCore, v7x only 64 MiB.  Size the scoped
    limit and the tile budget off the real capacity: bigger tiles / fully
    VMEM-resident weights on v5e/v6e, a conservative cap on v7x.
    """
    cap = 64 * 1024 * 1024  # conservative fallback if the query is unavailable
    try:
        info = pltpu.get_tpu_info()
        for attr in ("vmem_capacity_bytes", "vmem_bytes", "vmem_size_bytes"):
            val = getattr(info, attr, None)
            if val:
                cap = int(val)
                break
    except Exception:
        pass
    limit = min(cap * 3 // 4, 100 * 1024 * 1024)  # ~96 MiB v5e/v6e, ~48 MiB v7x
    budget = limit * 3 // 5                       # headroom for compiler scratch
    return limit, budget


def _choose_tiles(batch, in_dim, out_pad, x_bytes, w_bytes, o_bytes, budget):
    """Pick (tm, tn, tk).  tk < in_dim means the K axis must be grid-tiled."""
    half = max(budget // 2, 1)
    # v6e/v7x MXUs are 256x256: prefer 256-wide N tiles when out_pad allows.
    n_gran = 256 if out_pad % 256 == 0 else 128

    # N tile: largest multiple of n_gran whose double-buffered weight slab fits
    # half the budget (keeps the weight VMEM-resident across M tiles if it can).
    tn = out_pad
    while tn > n_gran and 2 * in_dim * tn * w_bytes > half:
        tn = max(n_gran, ((tn // 2) // n_gran) * n_gran)
    if tn > 128 and 2 * in_dim * tn * w_bytes > half:
        tn = 128  # last resort before K tiling

    # K tile: only if the weight slab still doesn't fit at the minimum N tile.
    tk = in_dim
    if 2 * in_dim * tn * w_bytes > half:
        kp = _round_up(in_dim, 128)  # the K-tiled path zero-pads K to this
        tk = max(128, (half // (2 * tn * w_bytes)) // 128 * 128)
        tk = min(tk, kp)
        while tk > 128 and kp % tk != 0:  # keep tk an exact divisor of padded K
            tk -= 128
    k_tiled = tk < in_dim

    # M tile: prefer the full batch (<=512 rows); shrink while the double-buffered
    # activation/output tiles (+ f32 accumulator when K-tiled) blow the budget.
    row_gran = _row_granularity(x_bytes)
    tm = min(512, batch)

    def m_bytes(tm_):
        return (2 * tm_ * tk * x_bytes + 2 * tm_ * tn * o_bytes
                + (tm_ * tn * 4 if k_tiled else 0))

    while tm > row_gran and m_bytes(tm) > half:
        tm = max(row_gran, _round_up(tm // 2, row_gran))
    return tm, tn, tk


_MEGACORE_MIN_FLOPS = 8.0e6


def _maybe_split_rows_for_megacore(batch, in_dim, out_pad, tm, tn, row_gran):
    """v7x has 2 TensorCores; a single-tile grid runs on one core only.  If the
    whole problem fits in one (tm, tn) tile but the work is non-trivial, halve
    the M tile so a "parallel" grid axis has >= 2 points (one extra ~0.35 us
    grid step on single-core chips, up to ~2x on v7x compute-bound shapes)."""
    if _cdiv(batch, tm) * _cdiv(out_pad, tn) > 1:
        return tm
    if 2.0 * batch * in_dim * out_pad < _MEGACORE_MIN_FLOPS:
        return tm
    half_rows = max(row_gran, _round_up(_cdiv(batch, 2), row_gran))
    return half_rows if half_rows < tm else tm


def _grid_and_maps(mt, nt, m_first):
    """Grid + index maps for the 2-D (no K tiling) kernels.  The inner (last,
    fastest-varying) grid axis is chosen so the block index of the *larger*
    operand stays constant across it -> that operand is DMA'd from HBM once."""
    if m_first:                       # N inner: activations fetched once
        grid = (mt, nt)
        amap = lambda i, j: (i, 0)
        wmap = lambda i, j: (0, j)
        bmap = lambda i, j: (0, j)
        omap = lambda i, j: (i, j)
    else:                             # M inner: weight fetched once
        grid = (nt, mt)
        amap = lambda j, i: (i, 0)
        wmap = lambda j, i: (0, j)
        bmap = lambda j, i: (0, j)
        omap = lambda j, i: (i, j)
    return grid, amap, wmap, bmap, omap


# --------------------------------------------------------------------------
# Pallas dispatchers
# --------------------------------------------------------------------------
def _linear_pallas(x, w, b2d, out_dtype, vmem_limit, budget):
    """y = x @ w + b2d, tiled over (M, N) and optionally K."""
    batch, in_dim = x.shape
    out_pad = w.shape[1]
    x_bytes = jnp.dtype(x.dtype).itemsize
    w_bytes = jnp.dtype(w.dtype).itemsize
    o_bytes = jnp.dtype(out_dtype).itemsize
    row_gran = _row_granularity(x_bytes)

    tm, tn, tk = _choose_tiles(batch, in_dim, out_pad, x_bytes, w_bytes,
                               o_bytes, budget)
    tm = _maybe_split_rows_for_megacore(batch, in_dim, out_pad, tm, tn, row_gran)
    mt, nt = _cdiv(batch, tm), _cdiv(out_pad, tn)
    out_shape = jax.ShapeDtypeStruct((batch, out_pad), out_dtype)

    if tk < in_dim:
        # ---- K-tiled path (very large in_dim). ----
        kp = _round_up(in_dim, 128)          # tk divides kp by construction
        if kp != in_dim:
            # TODO(synk): rare fallback - zero-padding K here costs one extra pass
            # over x and w; pre-pad in prepare_params if this path is ever hot.
            x = jnp.pad(x, ((0, 0), (0, kp - in_dim)))
            w = jnp.pad(w, ((0, kp - in_dim), (0, 0)))
        kt = kp // tk
        return pl.pallas_call(
            _one_dot_ktiled_kernel,
            out_shape=out_shape,
            grid_spec=pltpu.PrefetchScalarGridSpec(
                num_scalar_prefetch=0,
                grid=(mt, nt, kt),
                in_specs=[
                    pl.BlockSpec((tm, tk), lambda i, j, k: (i, k)),
                    pl.BlockSpec((tk, tn), lambda i, j, k: (k, j)),
                    pl.BlockSpec((1, tn), lambda i, j, k: (0, j)),
                ],
                out_specs=pl.BlockSpec((tm, tn), lambda i, j, k: (i, j)),
                scratch_shapes=[pltpu.VMEM((tm, tn), jnp.float32)],
            ),
            compiler_params=pltpu.CompilerParams(
                dimension_semantics=("parallel", "parallel", "arbitrary"),
                vmem_limit_bytes=vmem_limit),
        )(x, w, b2d)

    # ---- 2-D path: grid order chosen so the larger operand is streamed once. ----
    m_first = (batch * in_dim * x_bytes >= in_dim * out_pad * w_bytes
               or nt == 1 or mt == 1)
    grid, amap, wmap, bmap, omap = _grid_and_maps(mt, nt, m_first)
    return pl.pallas_call(
        _one_dot_kernel,
        out_shape=out_shape,
        grid_spec=pltpu.PrefetchScalarGridSpec(
            num_scalar_prefetch=0,
            grid=grid,
            in_specs=[
                pl.BlockSpec((tm, in_dim), amap),
                pl.BlockSpec((in_dim, tn), wmap),
                pl.BlockSpec((1, tn), bmap),
            ],
            out_specs=pl.BlockSpec((tm, tn), omap),
        ),
        compiler_params=pltpu.CompilerParams(
            dimension_semantics=("parallel", "parallel"),
            vmem_limit_bytes=vmem_limit),
    )(x, w, b2d)


def _two_dot_pallas(g, f, wg, wf, b2d, out_dtype, vmem_limit, budget):
    """y = g @ wg + f @ wf + b2d (== Linear(concat([g, f], axis=1)))."""
    batch, gdim = g.shape
    fdim = f.shape[1]
    in_dim = gdim + fdim
    out_pad = wg.shape[1]
    x_bytes = jnp.dtype(g.dtype).itemsize
    w_bytes = jnp.dtype(wg.dtype).itemsize
    o_bytes = jnp.dtype(out_dtype).itemsize
    row_gran = _row_granularity(x_bytes)

    tm, tn, tk = _choose_tiles(batch, in_dim, out_pad, x_bytes, w_bytes,
                               o_bytes, budget)
    if tk < in_dim:
        # Safety net: prepare_params picks the concat strategy whenever K tiling
        # would be required, so this should not trigger in practice.
        return _linear_pallas(jnp.concatenate([g, f], axis=1),
                              jnp.concatenate([wg, wf], axis=0),
                              b2d, out_dtype, vmem_limit, budget)

    tm = _maybe_split_rows_for_megacore(batch, in_dim, out_pad, tm, tn, row_gran)
    mt, nt = _cdiv(batch, tm), _cdiv(out_pad, tn)
    m_first = (batch * in_dim * x_bytes >= in_dim * out_pad * w_bytes
               or nt == 1 or mt == 1)
    grid, amap, wmap, bmap, omap = _grid_and_maps(mt, nt, m_first)
    return pl.pallas_call(
        _two_dot_kernel,
        out_shape=jax.ShapeDtypeStruct((batch, out_pad), out_dtype),
        grid_spec=pltpu.PrefetchScalarGridSpec(
            num_scalar_prefetch=0,
            grid=grid,
            in_specs=[
                pl.BlockSpec((tm, gdim), amap),
                pl.BlockSpec((tm, fdim), amap),
                pl.BlockSpec((gdim, tn), wmap),
                pl.BlockSpec((fdim, tn), wmap),
                pl.BlockSpec((1, tn), bmap),
            ],
            out_specs=pl.BlockSpec((tm, tn), omap),
        ),
        compiler_params=pltpu.CompilerParams(
            dimension_semantics=("parallel", "parallel"),
            vmem_limit_bytes=vmem_limit),
    )(g, f, wg, wf, b2d)


# --------------------------------------------------------------------------
# Parameter repacking (done ONCE, outside the per-call hot path)
# --------------------------------------------------------------------------
_SPLIT_MIN_IN_DIM = 257   # below this, one dot with K = gdim+fdim fills the MXU better


def prepare_params(weight, bias, global_dim, *, compute_dtype=jnp.bfloat16):
    """Repack PyTorch nn.Linear params once (outside the per-call hot path).

    weight: (out_dim, global_dim + fg_dim)   -- PyTorch layout
    bias:   (out_dim,)
    compute_dtype: dtype of the weight fed to the MXU.  bf16 (default) gives
      ~2x MXU throughput on every generation and halves the weight HBM/VMEM
      footprint; accumulation stays f32 inside the kernels.
    """
    out_dim, in_dim = weight.shape
    fg_dim = in_dim - global_dim
    assert fg_dim > 0, "weight must cover global_dim + fg_dim"

    out_pad = _round_up(out_dim, 128)           # lane-dense output stores
    w_t = weight.T.astype(compute_dtype)        # transpose / cast ONCE
    pad_n = out_pad - out_dim
    if pad_n:
        w_t = jnp.pad(w_t, ((0, 0), (0, pad_n)))
        bias = jnp.pad(bias, (0, pad_n))
    b2d = bias.astype(jnp.float32).reshape(1, out_pad)  # added to the f32 accumulator

    _, budget = _vmem_budgets()
    w_bytes = jnp.dtype(compute_dtype).itemsize
    # Strategy:
    #  * "concat": small K (two tiny dots under-fill the MXU contraction depth),
    #    or K so large that even a 128-wide weight tile won't fit VMEM -> route
    #    through the K-tiled single-dot kernel instead.
    #  * "split":  two dots g@Wg + f@Wf, no lane-axis concat of activations.
    needs_k_tiling = 2 * in_dim * 128 * w_bytes > budget // 2
    strategy = "concat" if (in_dim < _SPLIT_MIN_IN_DIM or needs_k_tiling) else "split"

    params = dict(strategy=strategy, global_dim=global_dim, fg_dim=fg_dim,
                  out_dim=out_dim, out_pad=out_pad, b=b2d)
    if strategy == "concat":
        params["w_cat"] = w_t
        if in_dim < _SPLIT_MIN_IN_DIM:
            params["w_g"] = w_t[:global_dim]   # tiny dup: enables fg_agg=None fast path
    else:
        params["w_g"] = w_t[:global_dim]
        params["w_f"] = w_t[global_dim:]
    return params


# --------------------------------------------------------------------------
# Forward
# --------------------------------------------------------------------------
_PALLAS_MIN_FLOPS = 2.0e6   # below this a standalone pallas_call is launch overhead


def concat_module_forward(global_embed, fg_agg, params, *,
                          prefer_pallas=None, trim_output=True):
    """Pallas equivalent of ConcatModule.forward(global_embed, fg_agg).

    prefer_pallas: True -> always use the Pallas kernels; False -> plain jnp
      (XLA fuses tiny problems with their neighbours); None -> auto by FLOPs.
    trim_output: slice off the lane-padding columns (costs one extra HBM
      read+write of the output); pass False if the consumer takes (B, out_pad).
    """
    gdim = params["global_dim"]
    fdim = params["fg_dim"]
    out_pad = params["out_pad"]
    out_dim = params["out_dim"]
    b2d = params["b"]
    B = global_embed.shape[0]
    out_dtype = global_embed.dtype
    assert global_embed.shape[1] == gdim
    if fg_agg is None:
        assert fdim == gdim, "fg_agg=None requires fg_dim == global_dim (zeros_like)"
    else:
        assert fg_agg.shape == (B, fdim)

    none_fast = fg_agg is None and "w_g" in params
    in_dim_eff = gdim if none_fast else gdim + fdim
    if prefer_pallas is None:
        prefer_pallas = 2.0 * B * in_dim_eff * out_pad >= _PALLAS_MIN_FLOPS

    if not prefer_pallas:
        # Tiny problems: plain XLA beats a standalone kernel's dispatch +
        # per-grid-step (~0.35 us) overhead and fuses with neighbouring ops.
        cdt = params["w_g"].dtype if "w_g" in params else params["w_cat"].dtype
        if none_fast:
            acc = jnp.dot(global_embed.astype(cdt), params["w_g"],
                          preferred_element_type=jnp.float32)
        else:
            fg = jnp.zeros_like(global_embed) if fg_agg is None else fg_agg
            if "w_cat" in params:
                fused = jnp.concatenate([global_embed, fg], axis=1)
                acc = jnp.dot(fused.astype(cdt), params["w_cat"],
                              preferred_element_type=jnp.float32)
            else:
                acc = (jnp.dot(global_embed.astype(cdt), params["w_g"],
                               preferred_element_type=jnp.float32)
                       + jnp.dot(fg.astype(cdt), params["w_f"],
                                 preferred_element_type=jnp.float32))
        out = (acc + b2d).astype(out_dtype)
        return out[:, :out_dim] if trim_output else out

    vmem_limit, budget = _vmem_budgets()

    if none_fast:
        # Specialized fg_agg=None path: the fg half contributes exactly zero ->
        # single dot over w_g; no zeros materialized, half the MXU/HBM work.
        out = _linear_pallas(global_embed, params["w_g"], b2d, out_dtype,
                             vmem_limit, budget)
    elif params["strategy"] == "concat":
        fg = jnp.zeros_like(global_embed) if fg_agg is None else fg_agg
        fused = jnp.concatenate([global_embed, fg], axis=1)
        out = _linear_pallas(fused, params["w_cat"], b2d, out_dtype,
                             vmem_limit, budget)
    else:
        fg = jnp.zeros_like(global_embed) if fg_agg is None else fg_agg
        out = _two_dot_pallas(global_embed, fg, params["w_g"], params["w_f"],
                              b2d, out_dtype, vmem_limit, budget)

    return out[:, :out_dim] if trim_output else out


def init_params(key, global_dim, fg_dim, out_dim, dtype=jnp.float32):
    """Deterministic nn.Linear-style init: U(-1/sqrt(fan_in), 1/sqrt(fan_in))."""
    in_dim = global_dim + fg_dim
    k_w, k_b = jax.random.split(key)
    bound = 1.0 / (in_dim ** 0.5)
    weight = jax.random.uniform(k_w, (out_dim, in_dim), dtype,
                                minval=-bound, maxval=bound)
    bias = jax.random.uniform(k_b, (out_dim,), dtype,
                              minval=-bound, maxval=bound)
    return weight, bias


# --------------------------------------------------------------------------
# Test
# --------------------------------------------------------------------------
if __name__ == "__main__":
    key = jax.random.PRNGKey(0)
    k_g, k_f, k_p = jax.random.split(key, 3)

    # Small shapes from the module spec: batch=8, global_dim=16, fg_dim=16, out=32.
    batch, global_dim, fg_dim, out_dim = 8, 16, 16, 32
    global_embed = jax.random.normal(k_g, (batch, global_dim), jnp.float32)
    fg_agg = jax.random.normal(k_f, (batch, fg_dim), jnp.float32)
    weight, bias = init_params(k_p, global_dim, fg_dim, out_dim)

    params = prepare_params(weight, bias, global_dim)   # one-time repack (bf16 weights)

    # These shapes are below the auto "use plain jnp" threshold; force the Pallas
    # path so the kernel itself is compiled and exercised.
    out = concat_module_forward(global_embed, fg_agg, params, prefer_pallas=True)
    jax.block_until_ready(out)
    ref = jnp.concatenate([global_embed, fg_agg], axis=1) @ weight.T + bias
    assert out.shape == (batch, out_dim)
    # Tolerance covers bf16 weight/activation quantization (accumulation is f32).
    assert jnp.allclose(out, ref, atol=5e-2, rtol=5e-2)

    # fg_agg=None path (specialized single-dot kernel, matches torch.zeros_like).
    out_none = concat_module_forward(global_embed, None, params, prefer_pallas=True)
    jax.block_until_ready(out_none)
    ref_none = (jnp.concatenate([global_embed, jnp.zeros_like(global_embed)], axis=1)
                @ weight.T + bias)
    assert out_none.shape == (batch, out_dim)
    assert jnp.allclose(out_none, ref_none, atol=5e-2, rtol=5e-2)

    # Slightly larger dims exercise the split two-dot kernel (auto-dispatched).
    batch2, gdim2, fdim2, odim2 = 256, 384, 256, 512
    g2 = jax.random.normal(k_g, (batch2, gdim2), jnp.float32)
    f2 = jax.random.normal(k_f, (batch2, fdim2), jnp.float32)
    w2, b2 = init_params(k_p, gdim2, fdim2, odim2)
    params2 = prepare_params(w2, b2, gdim2)
    out2 = concat_module_forward(g2, f2, params2)
    jax.block_until_ready(out2)
    ref2 = jnp.concatenate([g2, f2], axis=1) @ w2.T + b2
    assert out2.shape == (batch2, odim2)
    assert jnp.allclose(out2, ref2, atol=8e-2, rtol=8e-2)

    print("KERNEL_OK")
</pallas_src>

<mosaic_0001>
module attributes {stable_mosaic.version = 11 : i64} {
  func.func @_one_dot_kernel(%arg0: i32, %arg1: i32, %arg2: memref<8x32xf32, #tpu.memory_space<vmem>>, %arg3: memref<32x128xbf16, #tpu.memory_space<vmem>>, %arg4: memref<1x128xf32, #tpu.memory_space<vmem>>, %arg5: memref<8x128xf32, #tpu.memory_space<vmem>>) attributes {dimension_semantics = [#tpu.dimension_semantics<parallel>, #tpu.dimension_semantics<parallel>], iteration_bounds = array<i64: 1, 1>, scalar_prefetch = 0 : i64, scratch_operands = 0 : i64, tpu.core_type = #tpu.core_type<tc>, window_params = [{transform_indices = @transform_0, window_bounds = array<i64: 8, 32>}, {transform_indices = @transform_1, window_bounds = array<i64: 32, 128>}, {transform_indices = @transform_2, window_bounds = array<i64: 1, 128>}, {transform_indices = @transform_3, window_bounds = array<i64: 8, 128>}]} {
    %c0 = arith.constant 0 : index
    %c0_0 = arith.constant 0 : index
    %0 = vector.load %arg3[%c0, %c0_0] : memref<32x128xbf16, #tpu.memory_space<vmem>>, vector<32x128xbf16>
    %c0_1 = arith.constant 0 : index
    %c0_2 = arith.constant 0 : index
    %1 = vector.load %arg2[%c0_1, %c0_2] : memref<8x32xf32, #tpu.memory_space<vmem>>, vector<8x32xf32>
    %2 = arith.truncf %1 : vector<8x32xf32> to vector<8x32xbf16>
    %cst = arith.constant dense<0.000000e+00> : vector<8x128xf32>
    %3 = tpu.matmul %2, %0, %cst {dimension_numbers = #tpu.dot_dimension_numbers<[1], [0], [0], [1], [0, 0, 1, 1], [], []>} : vector<8x32xbf16>, vector<32x128xbf16>, vector<8x128xf32> -> vector<8x128xf32>
    %c0_3 = arith.constant 0 : index
    %c0_4 = arith.constant 0 : index
    %4 = vector.load %arg4[%c0_3, %c0_4] : memref<1x128xf32, #tpu.memory_space<vmem>>, vector<1x128xf32>
    %5 = vector.broadcast %4 : vector<1x128xf32> to vector<8x128xf32>
    %6 = arith.addf %3, %5 : vector<8x128xf32>
    %c0_5 = arith.constant 0 : index
    %c0_6 = arith.constant 0 : index
    %7 = vector.load %arg5[%c0_5, %c0_6] : memref<8x128xf32, #tpu.memory_space<vmem>>, vector<8x128xf32>
    tpu.vector_store %arg5[%c0_5, %c0_6], %6 {strides = array<i32>} : memref<8x128xf32, #tpu.memory_space<vmem>>, vector<8x128xf32>,
    return
  }
  func.func @transform_0(%arg0: i32, %arg1: i32) -> (i32, i32) {
    %c0_i32 = arith.constant 0 : i32
    %c0_i32_0 = arith.constant 0 : i32
    return %arg0, %c0_i32 : i32, i32
  }
  func.func @transform_1(%arg0: i32, %arg1: i32) -> (i32, i32) {
    %c0_i32 = arith.constant 0 : i32
    %c0_i32_0 = arith.constant 0 : i32
    return %c0_i32, %arg1 : i32, i32
  }
  func.func @transform_2(%arg0: i32, %arg1: i32) -> (i32, i32) {
    %c0_i32 = arith.constant 0 : i32
    %c0_i32_0 = arith.constant 0 : i32
    return %c0_i32, %arg1 : i32, i32
  }
  func.func @transform_3(%arg0: i32, %arg1: i32) -> (i32, i32) {
    %c0_i32 = arith.constant 0 : i32
    return %arg0, %arg1 : i32, i32
  }
}

</mosaic_0001>

<llo_original>
// kernel: tpu_custom_call.1
$region0: #{tpu_custom_call.1}
  #allocation0 [shape = 'u32[]', space=smem, size = 0x4, offset = 0x4, fixed_abs, tag = 'smem constant byte address 0x4 - core index']
  #allocation1 [shape = 'u32[144,128]{1,0:T(1,128)}', space=vmem, size = 0x12000, scoped, tag = 'internal scratch']
  %s0 = inlined_call_operand.hbm [shape: f32[8,32], index: 0, kind: input, shape index: {}]
  %s1 = inlined_call_operand.hbm [shape: bf16[32,128], index: 1, kind: input, shape index: {}]
  %s2 = inlined_call_operand.vmem [shape: f32[1,128], index: 2, kind: input, shape index: {}]
  %s3 = inlined_call_operand.hbm [shape: f32[8,128], index: 3, kind: output, shape index: {}]
  %s4 = sld [smem:[#allocation0]]
  $region30: #{tpu_custom_call.1} parent=0
    _
  %s6 = ssub.s32 1, %s4
  %s7 = scalar_select 0, %s6, %s4
  $region1: #{tpu_custom_call.1} parent=0
    #allocation2 [shape = 'u8[4096]{0}', space=vmem, size = 0x1000, scoped, tag = 'input window, operand 0, single buffered']
    #allocation3 [shape = 's32[1]{0}', space=sflag, size = 0x4, scoped, tag = 'scoped memory for tpu_custom_call.1']
    #allocation4 [shape = 's32[1]{0}', space=sflag, size = 0x4, scoped, tag = 'scoped memory for tpu_custom_call.1']
    #allocation5 [shape = 'u8[8192]{0}', space=vmem, size = 0x2000, scoped, tag = 'input window, operand 1, single buffered']
    #allocation6 [shape = 's32[1]{0}', space=sflag, size = 0x4, scoped, tag = 'scoped memory for tpu_custom_call.1']
    #allocation7 [shape = 'u8[4096]{0}', space=vmem, size = 0x1000, scoped, tag = 'output window, operand 0, single buffered']
    %8 = vsyncpa [#allocation3], 0
    %9 = vsyncpa [#allocation6], 0
    %10 = vsyncpa [#allocation4], 0
    // Predicated region
    $region2: #{tpu_custom_call.1} parent=1 // pred_check
      _
    $region3: #{tpu_custom_call.1} parent=1 // pred_check_branch
      %12 = sbr.rel (0) target = $region5
    $region4: #{tpu_custom_call.1} parent=1 // pred_region
      %s14 = ssub.s32 128, 128
      %15 = vsyncadd [#allocation3], %s14
      %s17 = sshll.u32 [#allocation2], 4
      %s18 = int_to_ptr.vmem [resolvable:$true] %s17
      %20 = dma.hbm_to_vmem [thread:$0]  %s0, 128, %s18, [#allocation3]
    $region5: #{tpu_custom_call.1} parent=1 // pred_fallthru
      _
    // Predicated region
    $region6: #{tpu_custom_call.1} parent=1 // pred_check
      _
    $region7: #{tpu_custom_call.1} parent=1 // pred_check_branch
      %22 = sbr.rel (0) target = $region9
    $region8: #{tpu_custom_call.1} parent=1 // pred_region
      %s24 = ssub.s32 256, 256
      %25 = vsyncadd [#allocation6], %s24
      %s26 = sshll.u32 [#allocation5], 4
      %s27 = int_to_ptr.vmem [resolvable:$true] %s26
      %32 = dma.hbm_to_vmem [thread:$0]  %s1, 256, %s27, [#allocation6], 64, 64, 4
    $region9: #{tpu_custom_call.1} parent=1 // pred_fallthru
      _
    // Predicated region
    $region10: #{tpu_custom_call.1} parent=1 // pred_check
      _
    $region11: #{tpu_custom_call.1} parent=1 // pred_check_branch
      %34 = sbr.rel (0) target = $region13
    $region12: #{tpu_custom_call.1} parent=1 // pred_region
      _
    $region13: #{tpu_custom_call.1} parent=1 // pred_fallthru
      _
    // Predicated region
    $region14: #{tpu_custom_call.1} parent=1 // pred_check
      _
    $region15: #{tpu_custom_call.1} parent=1 // pred_check_branch
      %36 = sbr.rel (0) target = $region17
    $region16: #{tpu_custom_call.1} parent=1 // pred_region
      %37 = dma.done [#allocation3], 128
    $region17: #{tpu_custom_call.1} parent=1 // pred_fallthru
      _
    // Predicated region
    $region18: #{tpu_custom_call.1} parent=1 // pred_check
      _
    $region19: #{tpu_custom_call.1} parent=1 // pred_check_branch
      %39 = sbr.rel (0) target = $region21
    $region20: #{tpu_custom_call.1} parent=1 // pred_region
      %40 = dma.done [#allocation6], 256
    $region21: #{tpu_custom_call.1} parent=1 // pred_fallthru
      _
    %v42 = vld [vmem:[#allocation5] sm:$0xf]
    %v43 = vld [vmem:[#allocation5 + $0x4] sm:$0xf]
    %v44 = vld [vmem:[#allocation5 + $0x8] sm:$0xf]
    %v45 = vld [vmem:[#allocation5 + $0xc] sm:$0xf]
    %v46 = vld [vmem:[#allocation2] sm:$0xff]
    %v47 = vpack.c.bf16 %v46, %v46
    %v48 = vld [vmem:[%s2] sm:$0x1]
    %v50 = vlaneseq
    %v51 = vshrl.u32 %v50, 7
    %v52 = vsub.s32 0, %v51
    %v53 = vrot.slane %v48, %v52
    %v59 = vunpack.c.l.b16 %v42
    %v60 = vunpack.c.l.b16 %v43
    %v61 = vunpack.c.l.b16 %v44
    %v62 = vunpack.c.l.b16 %v45
    %v63 = vpack.c.b16 %v60, %v59
    %v64 = vpack.c.b16 %v62, %v61
    %vm67 = vcmask 261120
    %v69 = vsel %vm67, %v47, 0
    %71 = vmatprep.subr.bf16.mxu0 0
    %72 = vmatpush1.bf16.msra.mxu0 0
    %73 = vmatprep.subr.bf16.mxu0 0
    %74 = vmatpush1.bf16.msra.mxu0 0
    %75 = vmatprep.subr.bf16.mxu0 0
    %76 = vmatpush1.bf16.msra.mxu0 0
    %77 = vmatprep.subr.bf16.mxu0 0
    %78 = vmatpush1.bf16.msra.mxu0 0
    %79 = vmatprep.subr.bf16.mxu0 0
    %80 = vmatpush1.bf16.msra.mxu0 0
    %81 = vmatprep.subr.bf16.mxu0 0
    %82 = vmatpush1.bf16.msra.mxu0 0
    %83 = vmatprep.subr.bf16.mxu0 0
    %84 = vmatpush1.bf16.msra.mxu0 %v64
    %85 = vmatprep.subr.bf16.mxu0 0
    %86 = vmatpush1.bf16.msra.mxu0 %v63
    %87 = vmatprep.subr.bf16.mxu0 0
    %88 = vmatpush2.bf16.msra.mxu0 0
    %89 = vmatprep.subr.bf16.mxu0 0
    %90 = vmatpush2.bf16.msra.mxu0 0
    %91 = vmatprep.subr.bf16.mxu0 0
    %92 = vmatpush2.bf16.msra.mxu0 0
    %93 = vmatprep.subr.bf16.mxu0 0
    %94 = vmatpush2.bf16.msra.mxu0 0
    %95 = vmatprep.subr.bf16.mxu0 0
    %96 = vmatpush2.bf16.msra.mxu0 0
    %97 = vmatprep.subr.bf16.mxu0 0
    %98 = vmatpush2.bf16.msra.mxu0 0
    %99 = vmatprep.subr.bf16.mxu0 0
    %100 = vmatpush2.bf16.msra.mxu0 0
    %101 = vmatprep.subr.bf16.mxu0 0
    %102 = vmatpush2.bf16.msra.mxu0 0
    %103 = vmatprep.mubr.bf16.mxu0 0
    %104 = vmatmul.mubr.bf16.gmra.mxu0 %v69
    %v105 = vpop.f32.mrf.mxu0
    %v106 = vadd.f32 %v53, %v105
    %v107 = vpop.f32.mrf.mxu0
    %v108 = vpop.f32.mrf.mxu0
    %v109 = vpop.f32.mrf.mxu0
    %110 = vdwg.mxu0
    %111 = vst [vmem:[#allocation7] sm:$0xff] %v106
    // Predicated region
    $region22: #{tpu_custom_call.1} parent=1 // pred_check
      _
    $region23: #{tpu_custom_call.1} parent=1 // pred_check_branch
      %113 = sbr.rel (0) target = $region25
    $region24: #{tpu_custom_call.1} parent=1 // pred_region
      %s115 = ssub.s32 128, 128
      %116 = vsyncadd [#allocation4], %s115
      %s118 = sshll.u32 [#allocation7], 4
      %s119 = int_to_ptr.vmem [resolvable:$true] %s118
      %121 = dma.vmem_to_hbm [thread:$0]  %s119, 128, %s3, [#allocation4]
    $region25: #{tpu_custom_call.1} parent=1 // pred_fallthru
      _
    // Predicated region
    $region26: #{tpu_custom_call.1} parent=1 // pred_check
      _
    $region27: #{tpu_custom_call.1} parent=1 // pred_check_branch
      %123 = sbr.rel (0) target = $region29
    $region28: #{tpu_custom_call.1} parent=1 // pred_region
      %124 = dma.done [#allocation4], 128
    $region29: #{tpu_custom_call.1} parent=1 // pred_fallthru
      _
    %125 = vsyncpa [#allocation3], 1
    %126 = vsyncpa [#allocation6], 1
    %127 = vsyncpa [#allocation4], 1

</llo_original>
